<compile_context>
chip_gen: v6e
topology: v6e:2x2x1
jax: 0.10.0
libtpu: 0.0.40
codegen_flags: <defaults>
</compile_context>

<pallas_src>
import functools

import jax
import jax.numpy as jnp
from jax.experimental import pallas as pl
from jax.experimental.pallas import tpu as pltpu

MAX_LOG_STD = 2.0
MIN_LOG_STD = -5.0


def _round_up(n, m):
    return ((n + m - 1) // m) * m


def fused_actor_critic_kernel(
    x_ref,
    w_in_ref, b_in_ref,     # (S, 2H), (1, 2H)
    w_h_ref, b_h_ref,       # (2H, 2H), (1, 2H)
    w_out_ref, b_out_ref,   # (2H, OUT_COLS), (1, OUT_COLS)
    out_ref,                # (TB, OUT_COLS) = [mu | std | value | zeros]
    *, action_dim,
):
    x = x_ref[...]

    # Layer 1 for both branches in one MXU pass: [a_pre | v_pre]
    h = jnp.tanh(
        jnp.dot(x.astype(w_in_ref.dtype), w_in_ref[...],
                preferred_element_type=jnp.float32) + b_in_ref[...]
    )
    # Layer 2 (block-diagonal): [a | v]
    h = jnp.tanh(
        jnp.dot(h.astype(w_h_ref.dtype), w_h_ref[...],
                preferred_element_type=jnp.float32) + b_h_ref[...]
    )
    # Heads: z = [mu_pre | log_std_pre | value | zero-pad]
    z = (
        jnp.dot(h.astype(w_out_ref.dtype), w_out_ref[...],
                preferred_element_type=jnp.float32) + b_out_ref[...]
    )

    # Column-wise post-processing on the narrow slab:
    #   cols [0, A)        -> mu (identity)
    #   cols [A, 2A)       -> std = exp(clip(log_std, -5, 2))
    #   col  2A            -> value (identity)
    #   cols [2A+1, pad)   -> zeros (identity)
    col = jax.lax.broadcasted_iota(jnp.int32, z.shape, dimension=1)
    is_std_col = (col >= action_dim) & (col < 2 * action_dim)
    std = jnp.exp(jnp.clip(z, MIN_LOG_STD, MAX_LOG_STD))
    out_ref[...] = jnp.where(is_std_col, std, z)


def _pack_params(params, out_cols, dot_dtype):
    """Trace-time packing of the 7 Linear layers into 3 weight slabs."""
    S, H = params["w1"].shape
    A = params["wmu"].shape[1]
    f32 = jnp.float32
    head_cols = 2 * A + 1

    # Layer 1: actor + critic side by side.
    w_in = jnp.concatenate([params["w1"], params["w3"]], axis=1)        # (S, 2H)
    b_in = jnp.concatenate([params["b1"], params["b3"]], axis=1)        # (1, 2H)

    # Layer 2: block diagonal so the branches stay independent.
    zhh = jnp.zeros((H, H), f32)
    w_h = jnp.concatenate(
        [jnp.concatenate([params["w2"], zhh], axis=1),
         jnp.concatenate([zhh, params["w4"]], axis=1)], axis=0)         # (2H, 2H)
    b_h = jnp.concatenate([params["b2"], params["b4"]], axis=1)         # (1, 2H)

    # Heads: actor rows feed mu/sigma, critic rows feed value; zero-pad lanes.
    w_top = jnp.concatenate(
        [params["wmu"], params["wsig"], jnp.zeros((H, 1), f32)], axis=1)  # (H, 2A+1)
    w_bot = jnp.concatenate(
        [jnp.zeros((H, 2 * A), f32), params["w5"]], axis=1)               # (H, 2A+1)
    w_out = jnp.concatenate([w_top, w_bot], axis=0)                       # (2H, 2A+1)
    w_out = jnp.pad(w_out, ((0, 0), (0, out_cols - head_cols)))           # (2H, OUT_COLS)
    b_out = jnp.concatenate([params["bmu"], params["bsig"], params["b5"]], axis=1)
    b_out = jnp.pad(b_out, ((0, 0), (0, out_cols - head_cols)))           # (1, OUT_COLS)

    # Optional bf16 matmul operands (v5e/v6e deployment); biases stay f32.
    w_in = w_in.astype(dot_dtype)
    w_h = w_h.astype(dot_dtype)
    w_out = w_out.astype(dot_dtype)
    return w_in, b_in, w_h, b_h, w_out, b_out


def actor_critic_forward(x, params, *, dot_dtype=jnp.float32,
                         max_tile_rows=4096, min_tiles=2):
    """x: (B, state_dim) float32. params: dict of (in,out) weights, (1,out) biases.

    Returns (mu, std, value) with shapes (B, A), (B, A), (B, 1).
    """
    B, S = x.shape
    A = params["wmu"].shape[1]
    head_cols = 2 * A + 1
    # Narrow (not 128-wide) output slab: block last-dim == array last-dim, so
    # the (8,128) BlockSpec rule is satisfied; masked vst is cheap here.
    OUT_COLS = max(8, _round_up(head_cols, 8))

    # Batch tiling: pad rows to the sublane granule, then pick a tile count
    # that is even and >= min_tiles when possible (v7x megacore sharding),
    # with each tile as large as possible up to max_tile_rows.
    pB = _round_up(B, 8)
    if pB >= 8 * min_tiles:
        num_tiles = min_tiles * max(1, pl.cdiv(pB, min_tiles * max_tile_rows))
    else:
        num_tiles = 1
    TB = _round_up(pl.cdiv(pB, num_tiles), 8)
    pB = num_tiles * TB

    x_p = x if pB == B else jnp.pad(x, ((0, pB - B), (0, 0)))
    x_p = x_p.astype(dot_dtype)
    grid = (num_tiles,)

    w_in, b_in, w_h, b_h, w_out, b_out = _pack_params(params, OUT_COLS, dot_dtype)

    def full(arr):
        # Weights/biases stay VMEM-resident across all batch tiles.
        return pl.BlockSpec(arr.shape, lambda i: (0,) * arr.ndim)

    kernel = functools.partial(fused_actor_critic_kernel, action_dim=A)

    fused_out = pl.pallas_call(
        kernel,
        out_shape=jax.ShapeDtypeStruct((pB, OUT_COLS), jnp.float32),
        grid=grid,
        in_specs=[
            pl.BlockSpec((TB, S), lambda i: (i, 0)),
            full(w_in), full(b_in),
            full(w_h), full(b_h),
            full(w_out), full(b_out),
        ],
        out_specs=pl.BlockSpec((TB, OUT_COLS), lambda i: (i, 0)),
        compiler_params=pltpu.CompilerParams(
            dimension_semantics=("parallel",),
            vmem_limit_bytes=32 * 1024 * 1024,
        ),
    )(x_p, w_in, b_in, w_h, b_h, w_out, b_out)

    mu = fused_out[:B, :A]
    std = fused_out[:B, A:2 * A]
    value = fused_out[:B, 2 * A:2 * A + 1]
    return mu, std, value


def init_params(key, state_dim, action_dim, hidden_size):
    """PyTorch-like uniform(-1/sqrt(fan_in), 1/sqrt(fan_in)) init.

    Weights stored as (in_features, out_features); biases as (1, out_features).
    """
    def linear(k, fan_in, fan_out):
        kw, kb = jax.random.split(k)
        bound = 1.0 / jnp.sqrt(jnp.float32(fan_in))
        w = jax.random.uniform(kw, (fan_in, fan_out), jnp.float32, -bound, bound)
        b = jax.random.uniform(kb, (1, fan_out), jnp.float32, -bound, bound)
        return w, b

    keys = jax.random.split(key, 7)
    p = {}
    p["w1"], p["b1"] = linear(keys[0], state_dim, hidden_size)
    p["w2"], p["b2"] = linear(keys[1], hidden_size, hidden_size)
    p["wmu"], p["bmu"] = linear(keys[2], hidden_size, action_dim)
    p["wsig"], p["bsig"] = linear(keys[3], hidden_size, action_dim)
    p["w3"], p["b3"] = linear(keys[4], state_dim, hidden_size)
    p["w4"], p["b4"] = linear(keys[5], hidden_size, hidden_size)
    p["w5"], p["b5"] = linear(keys[6], hidden_size, 1)
    return p


def reference_forward(x, p):
    a = jnp.tanh(x @ p["w1"] + p["b1"])
    a = jnp.tanh(a @ p["w2"] + p["b2"])
    mu = a @ p["wmu"] + p["bmu"]
    log_std = jnp.clip(a @ p["wsig"] + p["bsig"], MIN_LOG_STD, MAX_LOG_STD)
    v = jnp.tanh(x @ p["w3"] + p["b3"])
    v = jnp.tanh(v @ p["w4"] + p["b4"])
    v = v @ p["w5"] + p["b5"]
    return mu, jnp.exp(log_std), v


if __name__ == "__main__":
    state_dim = 16
    action_dim = 4
    hidden_size = 32

    key = jax.random.PRNGKey(0)
    kx, kp = jax.random.split(key)
    params = init_params(kp, state_dim, action_dim, hidden_size)

    # Small batch (single tile) and a larger batch (exercises the >=2-tile,
    # even-grid path used for v7x megacore sharding).
    for batch in (8, 96):
        xk = jax.random.fold_in(kx, batch)
        x = jax.random.normal(xk, (batch, state_dim), jnp.float32)

        # f32 MXU path (default) -- exact match against the pure-JAX reference.
        mu, std, value = actor_critic_forward(x, params)
        jax.block_until_ready((mu, std, value))

        mu_r, std_r, val_r = reference_forward(x, params)
        assert mu.shape == (batch, action_dim)
        assert std.shape == (batch, action_dim)
        assert value.shape == (batch, 1)
        assert jnp.allclose(mu, mu_r, atol=1e-5, rtol=1e-5)
        assert jnp.allclose(std, std_r, atol=1e-5, rtol=1e-5)
        assert jnp.allclose(value, val_r, atol=1e-5, rtol=1e-5)
        assert bool(jnp.all(std > 0))

        # Optional bf16-matmul path (v5e/v6e deployment lever): looser gate.
        mu_b, std_b, val_b = actor_critic_forward(x, params, dot_dtype=jnp.bfloat16)
        jax.block_until_ready((mu_b, std_b, val_b))
        assert jnp.allclose(mu_b, mu_r, atol=3e-2, rtol=3e-2)
        assert jnp.allclose(std_b, std_r, atol=3e-2, rtol=3e-2)
        assert jnp.allclose(val_b, val_r, atol=3e-2, rtol=3e-2)

    print("KERNEL_OK")
</pallas_src>

<mosaic_0001>
module attributes {stable_mosaic.version = 11 : i64} {
  func.func @fused_actor_critic_kernel(%arg0: i32, %arg1: memref<8x16xf32, #tpu.memory_space<vmem>>, %arg2: memref<16x64xf32, #tpu.memory_space<vmem>>, %arg3: memref<1x64xf32, #tpu.memory_space<vmem>>, %arg4: memref<64x64xf32, #tpu.memory_space<vmem>>, %arg5: memref<1x64xf32, #tpu.memory_space<vmem>>, %arg6: memref<64x16xf32, #tpu.memory_space<vmem>>, %arg7: memref<1x16xf32, #tpu.memory_space<vmem>>, %arg8: memref<8x16xf32, #tpu.memory_space<vmem>>) attributes {dimension_semantics = [#tpu.dimension_semantics<parallel>], iteration_bounds = array<i64: 1>, scalar_prefetch = 0 : i64, scratch_operands = 0 : i64, tpu.core_type = #tpu.core_type<tc>, window_params = [{transform_indices = @transform_0, window_bounds = array<i64: 8, 16>}, {pipeline_mode = #tpu.pipeline_mode<synchronous>, transform_indices = @transform_1, window_bounds = array<i64: 16, 64>}, {pipeline_mode = #tpu.pipeline_mode<synchronous>, transform_indices = @transform_2, window_bounds = array<i64: 1, 64>}, {pipeline_mode = #tpu.pipeline_mode<synchronous>, transform_indices = @transform_3, window_bounds = array<i64: 64, 64>}, {pipeline_mode = #tpu.pipeline_mode<synchronous>, transform_indices = @transform_4, window_bounds = array<i64: 1, 64>}, {pipeline_mode = #tpu.pipeline_mode<synchronous>, transform_indices = @transform_5, window_bounds = array<i64: 64, 16>}, {pipeline_mode = #tpu.pipeline_mode<synchronous>, transform_indices = @transform_6, window_bounds = array<i64: 1, 16>}, {transform_indices = @transform_7, window_bounds = array<i64: 8, 16>}]} {
    %c0 = arith.constant 0 : index
    %c0_0 = arith.constant 0 : index
    %0 = vector.load %arg1[%c0, %c0_0] : memref<8x16xf32, #tpu.memory_space<vmem>>, vector<8x16xf32>
    %c0_1 = arith.constant 0 : index
    %c0_2 = arith.constant 0 : index
    %1 = vector.load %arg2[%c0_1, %c0_2] : memref<16x64xf32, #tpu.memory_space<vmem>>, vector<16x64xf32>
    %cst = arith.constant dense<0.000000e+00> : vector<8x64xf32>
    %2 = tpu.matmul %0, %1, %cst {dimension_numbers = #tpu.dot_dimension_numbers<[1], [0], [0], [1], [0, 0, 1, 1], [], []>} : vector<8x16xf32>, vector<16x64xf32>, vector<8x64xf32> -> vector<8x64xf32>
    %c0_3 = arith.constant 0 : index
    %c0_4 = arith.constant 0 : index
    %3 = vector.load %arg3[%c0_3, %c0_4] : memref<1x64xf32, #tpu.memory_space<vmem>>, vector<1x64xf32>
    %4 = vector.broadcast %3 : vector<1x64xf32> to vector<8x64xf32>
    %5 = arith.addf %2, %4 : vector<8x64xf32>
    %6 = math.tanh %5 : vector<8x64xf32>
    %c0_5 = arith.constant 0 : index
    %c0_6 = arith.constant 0 : index
    %7 = vector.load %arg4[%c0_5, %c0_6] : memref<64x64xf32, #tpu.memory_space<vmem>>, vector<64x64xf32>
    %cst_7 = arith.constant dense<0.000000e+00> : vector<8x64xf32>
    %8 = tpu.matmul %6, %7, %cst_7 {dimension_numbers = #tpu.dot_dimension_numbers<[1], [0], [0], [1], [0, 0, 1, 1], [], []>} : vector<8x64xf32>, vector<64x64xf32>, vector<8x64xf32> -> vector<8x64xf32>
    %c0_8 = arith.constant 0 : index
    %c0_9 = arith.constant 0 : index
    %9 = vector.load %arg5[%c0_8, %c0_9] : memref<1x64xf32, #tpu.memory_space<vmem>>, vector<1x64xf32>
    %10 = vector.broadcast %9 : vector<1x64xf32> to vector<8x64xf32>
    %11 = arith.addf %8, %10 : vector<8x64xf32>
    %12 = math.tanh %11 : vector<8x64xf32>
    %c0_10 = arith.constant 0 : index
    %c0_11 = arith.constant 0 : index
    %13 = vector.load %arg6[%c0_10, %c0_11] : memref<64x16xf32, #tpu.memory_space<vmem>>, vector<64x16xf32>
    %cst_12 = arith.constant dense<0.000000e+00> : vector<8x16xf32>
    %14 = tpu.matmul %12, %13, %cst_12 {dimension_numbers = #tpu.dot_dimension_numbers<[1], [0], [0], [1], [0, 0, 1, 1], [], []>} : vector<8x64xf32>, vector<64x16xf32>, vector<8x16xf32> -> vector<8x16xf32>
    %c0_13 = arith.constant 0 : index
    %c0_14 = arith.constant 0 : index
    %15 = vector.load %arg7[%c0_13, %c0_14] : memref<1x16xf32, #tpu.memory_space<vmem>>, vector<1x16xf32>
    %16 = vector.broadcast %15 : vector<1x16xf32> to vector<8x16xf32>
    %17 = arith.addf %14, %16 : vector<8x16xf32>
    %18 = tpu.iota {dimensions = array<i32: 1>} : vector<8x16xi32>
    %c4_i32 = arith.constant 4 : i32
    %19 = vector.broadcast %c4_i32 : i32 to vector<8x16xi32>
    %20 = arith.cmpi sge, %18, %19 : vector<8x16xi32>
    %c8_i32 = arith.constant 8 : i32
    %21 = vector.broadcast %c8_i32 : i32 to vector<8x16xi32>
    %22 = arith.cmpi slt, %18, %21 : vector<8x16xi32>
    %23 = arith.andi %20, %22 : vector<8x16xi1>
    %cst_15 = arith.constant -5.000000e+00 : f32
    %cst_16 = arith.constant 2.000000e+00 : f32
    %24 = vector.broadcast %cst_15 : f32 to vector<8x16xf32>
    %25 = arith.maximumf %24, %17 : vector<8x16xf32>
    %26 = vector.broadcast %cst_16 : f32 to vector<8x16xf32>
    %27 = arith.minimumf %26, %25 : vector<8x16xf32>
    %28 = math.exp %27 : vector<8x16xf32>
    %29 = arith.select %23, %28, %17 : vector<8x16xi1>, vector<8x16xf32>
    %c0_17 = arith.constant 0 : index
    %c0_18 = arith.constant 0 : index
    %30 = vector.load %arg8[%c0_17, %c0_18] : memref<8x16xf32, #tpu.memory_space<vmem>>, vector<8x16xf32>
    tpu.vector_store %arg8[%c0_17, %c0_18], %29 {strides = array<i32>} : memref<8x16xf32, #tpu.memory_space<vmem>>, vector<8x16xf32>,
    return
  }
  func.func @transform_0(%arg0: i32) -> (i32, i32) {
    %c0_i32 = arith.constant 0 : i32
    %c0_i32_0 = arith.constant 0 : i32
    return %arg0, %c0_i32 : i32, i32
  }
  func.func @transform_1(%arg0: i32) -> (i32, i32) {
    %c0_i32 = arith.constant 0 : i32
    %c0_i32_0 = arith.constant 0 : i32
    %c0_i32_1 = arith.constant 0 : i32
    return %c0_i32, %c0_i32_0 : i32, i32
  }
  func.func @transform_2(%arg0: i32) -> (i32, i32) {
    %c0_i32 = arith.constant 0 : i32
    %c0_i32_0 = arith.constant 0 : i32
    %c0_i32_1 = arith.constant 0 : i32
    return %c0_i32, %c0_i32_0 : i32, i32
  }
  func.func @transform_3(%arg0: i32) -> (i32, i32) {
    %c0_i32 = arith.constant 0 : i32
    %c0_i32_0 = arith.constant 0 : i32
    %c0_i32_1 = arith.constant 0 : i32
    return %c0_i32, %c0_i32_0 : i32, i32
  }
  func.func @transform_4(%arg0: i32) -> (i32, i32) {
    %c0_i32 = arith.constant 0 : i32
    %c0_i32_0 = arith.constant 0 : i32
    %c0_i32_1 = arith.constant 0 : i32
    return %c0_i32, %c0_i32_0 : i32, i32
  }
  func.func @transform_5(%arg0: i32) -> (i32, i32) {
    %c0_i32 = arith.constant 0 : i32
    %c0_i32_0 = arith.constant 0 : i32
    %c0_i32_1 = arith.constant 0 : i32
    return %c0_i32, %c0_i32_0 : i32, i32
  }
  func.func @transform_6(%arg0: i32) -> (i32, i32) {
    %c0_i32 = arith.constant 0 : i32
    %c0_i32_0 = arith.constant 0 : i32
    %c0_i32_1 = arith.constant 0 : i32
    return %c0_i32, %c0_i32_0 : i32, i32
  }
  func.func @transform_7(%arg0: i32) -> (i32, i32) {
    %c0_i32 = arith.constant 0 : i32
    %c0_i32_0 = arith.constant 0 : i32
    return %arg0, %c0_i32 : i32, i32
  }
}

</mosaic_0001>

<llo_original>
// kernel: tpu_custom_call.1
$region0: #{tpu_custom_call.1}
  #allocation0 [shape = 'u32[]', space=smem, size = 0x4, offset = 0x4, fixed_abs, tag = 'smem constant byte address 0x4 - core index']
  #allocation1 [shape = 'u32[144,128]{1,0:T(1,128)}', space=vmem, size = 0x12000, scoped, tag = 'internal scratch']
  %s0 = inlined_call_operand.hbm [shape: f32[8,16], index: 0, kind: input, shape index: {}]
  %s1 = inlined_call_operand.vmem [shape: f32[16,64], index: 1, kind: input, shape index: {}]
  %s2 = inlined_call_operand.vmem [shape: f32[1,64], index: 2, kind: input, shape index: {}]
  %s3 = inlined_call_operand.vmem [shape: f32[64,64], index: 3, kind: input, shape index: {}]
  %s4 = inlined_call_operand.vmem [shape: f32[1,64], index: 4, kind: input, shape index: {}]
  %s5 = inlined_call_operand.vmem [shape: f32[64,16], index: 5, kind: input, shape index: {}]
  %s6 = inlined_call_operand.vmem [shape: f32[1,16], index: 6, kind: input, shape index: {}]
  %s7 = inlined_call_operand.hbm [shape: f32[8,16], index: 7, kind: output, shape index: {}]
  %s8 = sld [smem:[#allocation0]]
  $region42: #{tpu_custom_call.1} parent=0
    _
  %s10 = ssub.s32 1, %s8
  %s11 = scalar_select 0, %s10, %s8
  $region1: #{tpu_custom_call.1} parent=0
    #allocation2 [shape = 'u8[4096]{0}', space=vmem, size = 0x1000, scoped, tag = 'input window, operand 0, single buffered']
    #allocation3 [shape = 's32[1]{0}', space=sflag, size = 0x4, scoped, tag = 'scoped memory for tpu_custom_call.1']
    #allocation4 [shape = 's32[1]{0}', space=sflag, size = 0x4, scoped, tag = 'scoped memory for tpu_custom_call.1']
    #allocation5 [shape = 'u8[4096]{0}', space=vmem, size = 0x1000, scoped, tag = 'output window, operand 0, single buffered']
    %12 = vsyncpa [#allocation3], 0
    %13 = vsyncpa [#allocation4], 0
    // Predicated region
    $region2: #{tpu_custom_call.1} parent=1 // pred_check
      _
    $region3: #{tpu_custom_call.1} parent=1 // pred_check_branch
      %15 = sbr.rel (0) target = $region5
    $region4: #{tpu_custom_call.1} parent=1 // pred_region
      %s17 = ssub.s32 128, 128
      %18 = vsyncadd [#allocation3], %s17
      %s20 = sshll.u32 [#allocation2], 4
      %s21 = int_to_ptr.vmem [resolvable:$true] %s20
      %23 = dma.hbm_to_vmem [thread:$0]  %s0, 128, %s21, [#allocation3]
    $region5: #{tpu_custom_call.1} parent=1 // pred_fallthru
      _
    // Predicated region
    $region6: #{tpu_custom_call.1} parent=1 // pred_check
      _
    $region7: #{tpu_custom_call.1} parent=1 // pred_check_branch
      %25 = sbr.rel (0) target = $region9
    $region8: #{tpu_custom_call.1} parent=1 // pred_region
      _
    $region9: #{tpu_custom_call.1} parent=1 // pred_fallthru
      _
    // Predicated region
    $region10: #{tpu_custom_call.1} parent=1 // pred_check
      _
    $region11: #{tpu_custom_call.1} parent=1 // pred_check_branch
      %27 = sbr.rel (0) target = $region13
    $region12: #{tpu_custom_call.1} parent=1 // pred_region
      _
    $region13: #{tpu_custom_call.1} parent=1 // pred_fallthru
      _
    // Predicated region
    $region14: #{tpu_custom_call.1} parent=1 // pred_check
      _
    $region15: #{tpu_custom_call.1} parent=1 // pred_check_branch
      %29 = sbr.rel (0) target = $region17
    $region16: #{tpu_custom_call.1} parent=1 // pred_region
      _
    $region17: #{tpu_custom_call.1} parent=1 // pred_fallthru
      _
    // Predicated region
    $region18: #{tpu_custom_call.1} parent=1 // pred_check
      _
    $region19: #{tpu_custom_call.1} parent=1 // pred_check_branch
      %31 = sbr.rel (0) target = $region21
    $region20: #{tpu_custom_call.1} parent=1 // pred_region
      _
    $region21: #{tpu_custom_call.1} parent=1 // pred_fallthru
      _
    // Predicated region
    $region22: #{tpu_custom_call.1} parent=1 // pred_check
      _
    $region23: #{tpu_custom_call.1} parent=1 // pred_check_branch
      %33 = sbr.rel (0) target = $region25
    $region24: #{tpu_custom_call.1} parent=1 // pred_region
      _
    $region25: #{tpu_custom_call.1} parent=1 // pred_fallthru
      _
    // Predicated region
    $region26: #{tpu_custom_call.1} parent=1 // pred_check
      _
    $region27: #{tpu_custom_call.1} parent=1 // pred_check_branch
      %35 = sbr.rel (0) target = $region29
    $region28: #{tpu_custom_call.1} parent=1 // pred_region
      _
    $region29: #{tpu_custom_call.1} parent=1 // pred_fallthru
      _
    // Predicated region
    $region30: #{tpu_custom_call.1} parent=1 // pred_check
      _
    $region31: #{tpu_custom_call.1} parent=1 // pred_check_branch
      %37 = sbr.rel (0) target = $region33
    $region32: #{tpu_custom_call.1} parent=1 // pred_region
      %38 = dma.done [#allocation3], 128
    $region33: #{tpu_custom_call.1} parent=1 // pred_fallthru
      _
    %v39 = vld [vmem:[#allocation2] sm:$0xff]
    %v40 = vld [vmem:[%s1] sm:$0xff]
    %v41 = vld [vmem:[%s1 + $0x8] sm:$0xff]
    %v42 = vld [vmem:[%s2] sm:$0x1]
    %v44 = vlaneseq
    %v45 = vshrl.u32 %v44, 7
    %v46 = vsub.s32 0, %v45
    %v47 = vrot.slane %v42, %v46
    %vm49 = vcmask 130048
    %v51 = vsel %vm49, %v39, 0
    %53 = vmatprep.subr.mxu0 0.0
    %54 = vmatpush1.msra.mxu0 0.0
    %55 = vmatprep.subr.mxu0 0.0
    %56 = vmatpush1.msra.mxu0 0.0
    %57 = vmatprep.subr.mxu0 0.0
    %58 = vmatpush1.msra.mxu0 0.0
    %59 = vmatprep.subr.mxu0 0.0
    %60 = vmatpush1.msra.mxu0 0.0
    %61 = vmatprep.subr.mxu0 0.0
    %62 = vmatpush1.msra.mxu0 0.0
    %63 = vmatprep.subr.mxu0 0.0
    %64 = vmatpush1.msra.mxu0 0.0
    %65 = vmatprep.subr.mxu0 0.0
    %66 = vmatpush1.msra.mxu0 0.0
    %67 = vmatprep.subr.mxu0 0.0
    %68 = vmatpush1.msra.mxu0 0.0
    %69 = vmatprep.subr.mxu0 0.0
    %70 = vmatpush1.msra.mxu0 0.0
    %71 = vmatprep.subr.mxu0 0.0
    %72 = vmatpush1.msra.mxu0 0.0
    %73 = vmatprep.subr.mxu0 0.0
    %74 = vmatpush1.msra.mxu0 0.0
    %75 = vmatprep.subr.mxu0 0.0
    %76 = vmatpush1.msra.mxu0 0.0
    %77 = vmatprep.subr.mxu0 0.0
    %78 = vmatpush1.msra.mxu0 0.0
    %79 = vmatprep.subr.mxu0 0.0
    %80 = vmatpush1.msra.mxu0 0.0
    %81 = vmatprep.subr.mxu0 0.0
    %82 = vmatpush1.msra.mxu0 %v41
    %83 = vmatprep.subr.mxu0 0.0
    %84 = vmatpush1.msra.mxu0 %v40
    %85 = vmatprep.subr.mxu0 0.0
    %86 = vmatpush2.msra.mxu0 0.0
    %87 = vmatprep.subr.mxu0 0.0
    %88 = vmatpush2.msra.mxu0 0.0
    %89 = vmatprep.subr.mxu0 0.0
    %90 = vmatpush2.msra.mxu0 0.0
    %91 = vmatprep.subr.mxu0 0.0
    %92 = vmatpush2.msra.mxu0 0.0
    %93 = vmatprep.subr.mxu0 0.0
    %94 = vmatpush2.msra.mxu0 0.0
    %95 = vmatprep.subr.mxu0 0.0
    %96 = vmatpush2.msra.mxu0 0.0
    %97 = vmatprep.subr.mxu0 0.0
    %98 = vmatpush2.msra.mxu0 0.0
    %99 = vmatprep.subr.mxu0 0.0
    %100 = vmatpush2.msra.mxu0 0.0
    %101 = vmatprep.subr.mxu0 0.0
    %102 = vmatpush2.msra.mxu0 0.0
    %103 = vmatprep.subr.mxu0 0.0
    %104 = vmatpush2.msra.mxu0 0.0
    %105 = vmatprep.subr.mxu0 0.0
    %106 = vmatpush2.msra.mxu0 0.0
    %107 = vmatprep.subr.mxu0 0.0
    %108 = vmatpush2.msra.mxu0 0.0
    %109 = vmatprep.subr.mxu0 0.0
    %110 = vmatpush2.msra.mxu0 0.0
    %111 = vmatprep.subr.mxu0 0.0
    %112 = vmatpush2.msra.mxu0 0.0
    %113 = vmatprep.subr.mxu0 0.0
    %114 = vmatpush2.msra.mxu0 0.0
    %115 = vmatprep.subr.mxu0 0.0
    %116 = vmatpush2.msra.mxu0 0.0
    %117 = vmatprep.mubr.f32.mxu0 0.0
    %118 = vmatmul.mubr.f32.gmra.mxu0 %v51
    %v119 = vpop.f32.mrf.mxu0
    %v120 = vadd.f32 %v47, %v119
    %v121 = vpop.f32.mrf.mxu0
    %122 = vdwg.mxu0
    %v123 = vtanh.pop %v120
    %v124 = vld [vmem:[%s3] sm:$0xff]
    %v125 = vld [vmem:[%s3 + $0x8] sm:$0xff]
    %v126 = vld [vmem:[%s3 + $0x10] sm:$0xff]
    %v127 = vld [vmem:[%s3 + $0x18] sm:$0xff]
    %v128 = vld [vmem:[%s3 + $0x20] sm:$0xff]
    %v129 = vld [vmem:[%s3 + $0x28] sm:$0xff]
    %v130 = vld [vmem:[%s3 + $0x30] sm:$0xff]
    %v131 = vld [vmem:[%s3 + $0x38] sm:$0xff]
    %v132 = vld [vmem:[%s4] sm:$0x1]
    %v134 = vlaneseq
    %v135 = vshrl.u32 %v134, 7
    %v136 = vsub.s32 0, %v135
    %v137 = vrot.slane %v132, %v136
    %vm139 = vcmask 523264
    %v141 = vsel %vm139, %v123, 0
    %143 = vmatprep.subr.mxu0 0.0
    %144 = vmatpush1.msra.mxu0 0.0
    %145 = vmatprep.subr.mxu0 0.0
    %146 = vmatpush1.msra.mxu0 0.0
    %147 = vmatprep.subr.mxu0 0.0
    %148 = vmatpush1.msra.mxu0 0.0
    %149 = vmatprep.subr.mxu0 0.0
    %150 = vmatpush1.msra.mxu0 0.0
    %151 = vmatprep.subr.mxu0 0.0
    %152 = vmatpush1.msra.mxu0 0.0
    %153 = vmatprep.subr.mxu0 0.0
    %154 = vmatpush1.msra.mxu0 0.0
    %155 = vmatprep.subr.mxu0 0.0
    %156 = vmatpush1.msra.mxu0 0.0
    %157 = vmatprep.subr.mxu0 0.0
    %158 = vmatpush1.msra.mxu0 0.0
    %159 = vmatprep.subr.mxu0 0.0
    %160 = vmatpush1.msra.mxu0 %v131
    %161 = vmatprep.subr.mxu0 0.0
    %162 = vmatpush1.msra.mxu0 %v130
    %163 = vmatprep.subr.mxu0 0.0
    %164 = vmatpush1.msra.mxu0 %v129
    %165 = vmatprep.subr.mxu0 0.0
    %166 = vmatpush1.msra.mxu0 %v128
    %167 = vmatprep.subr.mxu0 0.0
    %168 = vmatpush1.msra.mxu0 %v127
    %169 = vmatprep.subr.mxu0 0.0
    %170 = vmatpush1.msra.mxu0 %v126
    %171 = vmatprep.subr.mxu0 0.0
    %172 = vmatpush1.msra.mxu0 %v125
    %173 = vmatprep.subr.mxu0 0.0
    %174 = vmatpush1.msra.mxu0 %v124
    %175 = vmatprep.subr.mxu0 0.0
    %176 = vmatpush2.msra.mxu0 0.0
    %177 = vmatprep.subr.mxu0 0.0
    %178 = vmatpush2.msra.mxu0 0.0
    %179 = vmatprep.subr.mxu0 0.0
    %180 = vmatpush2.msra.mxu0 0.0
    %181 = vmatprep.subr.mxu0 0.0
    %182 = vmatpush2.msra.mxu0 0.0
    %183 = vmatprep.subr.mxu0 0.0
    %184 = vmatpush2.msra.mxu0 0.0
    %185 = vmatprep.subr.mxu0 0.0
    %186 = vmatpush2.msra.mxu0 0.0
    %187 = vmatprep.subr.mxu0 0.0
    %188 = vmatpush2.msra.mxu0 0.0
    %189 = vmatprep.subr.mxu0 0.0
    %190 = vmatpush2.msra.mxu0 0.0
    %191 = vmatprep.subr.mxu0 0.0
    %192 = vmatpush2.msra.mxu0 0.0
    %193 = vmatprep.subr.mxu0 0.0
    %194 = vmatpush2.msra.mxu0 0.0
    %195 = vmatprep.subr.mxu0 0.0
    %196 = vmatpush2.msra.mxu0 0.0
    %197 = vmatprep.subr.mxu0 0.0
    %198 = vmatpush2.msra.mxu0 0.0
    %199 = vmatprep.subr.mxu0 0.0
    %200 = vmatpush2.msra.mxu0 0.0
    %201 = vmatprep.subr.mxu0 0.0
    %202 = vmatpush2.msra.mxu0 0.0
    %203 = vmatprep.subr.mxu0 0.0
    %204 = vmatpush2.msra.mxu0 0.0
    %205 = vmatprep.subr.mxu0 0.0
    %206 = vmatpush2.msra.mxu0 0.0
    %207 = vmatprep.mubr.f32.mxu0 0.0
    %208 = vmatmul.mubr.f32.gmra.mxu0 %v141
    %v209 = vpop.f32.mrf.mxu0
    %v210 = vadd.f32 %v137, %v209
    %v211 = vpop.f32.mrf.mxu0
    %212 = vdwg.mxu0
    %v213 = vtanh.pop %v210
    %v214 = vld [vmem:[%s5] sm:$0xff]
    %v215 = vld [vmem:[%s5 + $0x8] sm:$0xff]
    %v216 = vld [vmem:[%s5 + $0x10] sm:$0xff]
    %v217 = vld [vmem:[%s5 + $0x18] sm:$0xff]
    %v218 = vld [vmem:[%s5 + $0x20] sm:$0xff]
    %v219 = vld [vmem:[%s5 + $0x28] sm:$0xff]
    %v220 = vld [vmem:[%s5 + $0x30] sm:$0xff]
    %v221 = vld [vmem:[%s5 + $0x38] sm:$0xff]
    %v222 = vld [vmem:[%s6] sm:$0x1]
    %v224 = vlaneseq
    %v225 = vshrl.u32 %v224, 7
    %v226 = vsub.s32 0, %v225
    %v227 = vrot.slane %v222, %v226
    %v230 = vsel %vm139, %v213, 0
    %232 = vmatprep.subr.mxu0 0.0
    %233 = vmatpush1.msra.mxu0 0.0
    %234 = vmatprep.subr.mxu0 0.0
    %235 = vmatpush1.msra.mxu0 0.0
    %236 = vmatprep.subr.mxu0 0.0
    %237 = vmatpush1.msra.mxu0 0.0
    %238 = vmatprep.subr.mxu0 0.0
    %239 = vmatpush1.msra.mxu0 0.0
    %240 = vmatprep.subr.mxu0 0.0
    %241 = vmatpush1.msra.mxu0 0.0
    %242 = vmatprep.subr.mxu0 0.0
    %243 = vmatpush1.msra.mxu0 0.0
    %244 = vmatprep.subr.mxu0 0.0
    %245 = vmatpush1.msra.mxu0 0.0
    %246 = vmatprep.subr.mxu0 0.0
    %247 = vmatpush1.msra.mxu0 0.0
    %248 = vmatprep.subr.mxu0 0.0
    %249 = vmatpush1.msra.mxu0 %v221
    %250 = vmatprep.subr.mxu0 0.0
    %251 = vmatpush1.msra.mxu0 %v220
    %252 = vmatprep.subr.mxu0 0.0
    %253 = vmatpush1.msra.mxu0 %v219
    %254 = vmatprep.subr.mxu0 0.0
    %255 = vmatpush1.msra.mxu0 %v218
    %256 = vmatprep.subr.mxu0 0.0
    %257 = vmatpush1.msra.mxu0 %v217
    %258 = vmatprep.subr.mxu0 0.0
    %259 = vmatpush1.msra.mxu0 %v216
    %260 = vmatprep.subr.mxu0 0.0
    %261 = vmatpush1.msra.mxu0 %v215
    %262 = vmatprep.subr.mxu0 0.0
    %263 = vmatpush1.msra.mxu0 %v214
    %264 = vmatprep.subr.mxu0 0.0
    %265 = vmatpush2.msra.mxu0 0.0
    %266 = vmatprep.subr.mxu0 0.0
    %267 = vmatpush2.msra.mxu0 0.0
    %268 = vmatprep.subr.mxu0 0.0
    %269 = vmatpush2.msra.mxu0 0.0
    %270 = vmatprep.subr.mxu0 0.0
    %271 = vmatpush2.msra.mxu0 0.0
    %272 = vmatprep.subr.mxu0 0.0
    %273 = vmatpush2.msra.mxu0 0.0
    %274 = vmatprep.subr.mxu0 0.0
    %275 = vmatpush2.msra.mxu0 0.0
    %276 = vmatprep.subr.mxu0 0.0
    %277 = vmatpush2.msra.mxu0 0.0
    %278 = vmatprep.subr.mxu0 0.0
    %279 = vmatpush2.msra.mxu0 0.0
    %280 = vmatprep.subr.mxu0 0.0
    %281 = vmatpush2.msra.mxu0 0.0
    %282 = vmatprep.subr.mxu0 0.0
    %283 = vmatpush2.msra.mxu0 0.0
    %284 = vmatprep.subr.mxu0 0.0
    %285 = vmatpush2.msra.mxu0 0.0
    %286 = vmatprep.subr.mxu0 0.0
    %287 = vmatpush2.msra.mxu0 0.0
    %288 = vmatprep.subr.mxu0 0.0
    %289 = vmatpush2.msra.mxu0 0.0
    %290 = vmatprep.subr.mxu0 0.0
    %291 = vmatpush2.msra.mxu0 0.0
    %292 = vmatprep.subr.mxu0 0.0
    %293 = vmatpush2.msra.mxu0 0.0
    %294 = vmatprep.subr.mxu0 0.0
    %295 = vmatpush2.msra.mxu0 0.0
    %296 = vmatprep.mubr.f32.mxu0 0.0
    %297 = vmatmul.mubr.f32.gmra.mxu0 %v230
    %v298 = vpop.f32.mrf.mxu0
    %v299 = vadd.f32 %v227, %v298
    %v300 = vpop.f32.mrf.mxu0
    %301 = vdwg.mxu0
    %v302 = vlaneseq
    %v303 = vand.u32 %v302, 127
    %vm304 = vcmp.ge.s32.totalorder %v303, 4
    %vm305 = vcmp.lt.s32.totalorder %v303, 8
    %vm306 = vmand %vm304, %vm305
    %v307 = vmax.f32 %v299, -5.0
    %v308 = vmin.f32 %v307, 2.0
    %v309 = vmul.f32 %v308, 1.442695
    %v310 = vpow.pop %v309
    %v311 = vsel %vm306, %v310, %v299
    %312 = vst.msk [vmem:[#allocation5] sm:$0xff] %vm49, %v311
    // Predicated region
    $region34: #{tpu_custom_call.1} parent=1 // pred_check
      _
    $region35: #{tpu_custom_call.1} parent=1 // pred_check_branch
      %314 = sbr.rel (0) target = $region37
    $region36: #{tpu_custom_call.1} parent=1 // pred_region
      %s316 = ssub.s32 128, 128
      %317 = vsyncadd [#allocation4], %s316
      %s319 = sshll.u32 [#allocation5], 4
      %s320 = int_to_ptr.vmem [resolvable:$true] %s319
      %322 = dma.vmem_to_hbm [thread:$0]  %s320, 128, %s7, [#allocation4]
    $region37: #{tpu_custom_call.1} parent=1 // pred_fallthru
      _
    // Predicated region
    $region38: #{tpu_custom_call.1} parent=1 // pred_check
      _
    $region39: #{tpu_custom_call.1} parent=1 // pred_check_branch
      %324 = sbr.rel (0) target = $region41
    $region40: #{tpu_custom_call.1} parent=1 // pred_region
      %325 = dma.done [#allocation4], 128
    $region41: #{tpu_custom_call.1} parent=1 // pred_fallthru
      _
    %326 = vsyncpa [#allocation3], 1
    %327 = vsyncpa [#allocation4], 1

</llo_original>
